<compile_context>
chip_gen: v5e
topology: v5e:2x2
jax: 0.10.0
libtpu: 0.0.40
codegen_flags: <defaults>
</compile_context>

<pallas_src>
import jax
import jax.numpy as jnp
from jax.experimental import pallas as pl
from jax.experimental.pallas import tpu as pltpu

HIDDEN = 128


def _round_up(x, m):
    return ((x + m - 1) // m) * m


def _default_compute_dtype():
    """bf16 VALU exists on v6e / v7x; older generations (v5e and below) would
    only pay convert ops, so keep them in f32."""
    try:
        kind = jax.devices()[0].device_kind.lower()
    except Exception:
        return jnp.float32
    if ("v6" in kind) or ("v7" in kind) or ("7x" in kind):
        return jnp.bfloat16
    return jnp.float32


def critic_kernel(xT_ref, w_ref, b2_ref, o_ref):
    """Fused critic forward on one batch tile (feature-major layout).

    xT_ref : (S_pad, TB)            batch tile, batch along lanes (compute dtype)
    w_ref  : (HIDDEN, n_states + 2) packed resident [w1^T | b1 | w2] (compute dtype)
    b2_ref : (1, 1)                 scalar output bias in SMEM (f32)
    o_ref  : (1, TB)                lane-dense f32 output tile
    """
    n_states = w_ref.shape[1] - 2
    hidden = w_ref.shape[0]
    tb = xT_ref.shape[1]

    # Chunk height = one vreg worth of sublanes: 8 for f32, 16 for packed bf16.
    ch = 16 if xT_ref.dtype == jnp.bfloat16 else 8
    assert hidden % ch == 0

    # Hoist the per-feature row loads + sublane broadcasts out of the chunk loop
    # (shared by every hidden chunk; JAX does not CSE broadcast_in_dim).
    x_rows = [jnp.broadcast_to(xT_ref[k:k + 1, :], (ch, tb))
              for k in range(n_states)]

    # Fused hidden layer + value head: never materialize the (128, TB) hidden
    # activation; accumulate h_chunk * w2_chunk into one (ch, TB) f32 accumulator.
    acc = jnp.zeros((ch, tb), jnp.float32)
    for c in range(hidden // ch):                       # static unroll (8 or 16)
        r0 = c * ch
        wc = w_ref[r0:r0 + ch, :]                       # (ch, n_states + 2)
        h = wc[:, 0:1] * x_rows[0]                      # K=3 FMA chain on the VPU
        for k in range(1, n_states):
            h = h + wc[:, k:k + 1] * x_rows[k]
        h = jnp.maximum(h + wc[:, n_states:n_states + 1], 0.0)       # + b1, ReLU
        acc = acc + (h * wc[:, n_states + 1:]).astype(jnp.float32)   # * w2 slice
    v = jnp.sum(acc, axis=0, keepdims=True)             # one sublane reduce (XLU)
    o_ref[...] = (v + b2_ref[0, 0]).astype(o_ref.dtype)


def critic_forward(x, w1, b1, w2, b2, *, tile_b=4096, compute_dtype=None,
                   xla_fastpath_max_batch=128):
    """CriticNet forward: x (B, n_states) -> v (B, 1), f32."""
    B, n_states = x.shape
    assert w1.shape == (n_states, HIDDEN)
    assert tile_b > 0 and tile_b % 128 == 0, "tile_b must be a multiple of 128"

    w2c = jnp.reshape(w2, (HIDDEN, 1))

    # Tiny online-inference batches: a Pallas launch is pure fixed overhead
    # there, so just run the two dots in XLA.
    if B <= xla_fastpath_max_batch:
        hp = jax.lax.Precision.HIGHEST
        h = jnp.maximum(jnp.dot(x, w1, precision=hp) + b1, 0.0)
        return jnp.dot(h, w2c, precision=hp) + b2

    if compute_dtype is None:
        compute_dtype = _default_compute_dtype()
    cdt = compute_dtype

    # ---- batch tiling ------------------------------------------------------
    B128 = _round_up(B, 128)
    if B128 <= 128:
        n_steps = 1
    else:
        # Keep >= 2 grid steps so dimension_semantics=("parallel",) can shard
        # the batch across both TensorCores on v7x; add more steps only when
        # the tile_b cap requires it.  Per-step VMEM stays far under scoped
        # limits on v5e/v6e/v7x even at 4096-column tiles.
        n_steps = max(2, pl.cdiv(B128, tile_b))
    TB = _round_up(pl.cdiv(B128, n_steps), 128)
    Bp = n_steps * TB

    # ---- operand layout ----------------------------------------------------
    # Feature-major, lane-dense batch axis; features pad sublanes (3 -> 8).
    # Padded batch columns compute relu(b1).w2 + b2 garbage, sliced off below.
    S_pad = _round_up(n_states, 8)
    xT = jnp.pad(x.T.astype(cdt), ((0, S_pad - n_states), (0, Bp - B)))
    # Packed resident weights: [w1^T | b1 | w2] -> (HIDDEN, n_states + 2).
    wpack = jnp.concatenate(
        [w1.T, jnp.reshape(b1, (HIDDEN, 1)), w2c], axis=1).astype(cdt)
    b2s = jnp.reshape(b2, (1, 1)).astype(jnp.float32)

    out = pl.pallas_call(
        critic_kernel,
        out_shape=jax.ShapeDtypeStruct((1, Bp), jnp.float32),
        grid=(n_steps,),
        in_specs=[
            pl.BlockSpec((S_pad, TB), lambda i: (0, i)),             # x tile
            pl.BlockSpec((HIDDEN, n_states + 2), lambda i: (0, 0)),  # packed W
            pl.BlockSpec(memory_space=pltpu.MemorySpace.SMEM),       # b2 scalar
        ],
        out_specs=pl.BlockSpec((1, TB), lambda i: (0, i)),
        compiler_params=pltpu.CompilerParams(
            dimension_semantics=("parallel",),   # batch axis -> both TCs on v7x
        ),
    )(xT, wpack, b2s)

    return out[0, :B].reshape(B, 1)


def init_params(key, n_states, hidden=HIDDEN):
    """PyTorch nn.Linear-style init: U[-1/sqrt(fan_in), 1/sqrt(fan_in)]."""
    k1, k2, k3, k4 = jax.random.split(key, 4)
    bound1 = 1.0 / jnp.sqrt(n_states * 1.0)
    bound2 = 1.0 / jnp.sqrt(hidden * 1.0)
    w1 = jax.random.uniform(k1, (n_states, hidden), jnp.float32, -bound1, bound1)
    b1 = jax.random.uniform(k2, (hidden,), jnp.float32, -bound1, bound1)
    w2 = jax.random.uniform(k3, (hidden,), jnp.float32, -bound2, bound2)
    b2 = jax.random.uniform(k4, (), jnp.float32, -bound2, bound2)
    return w1, b1, w2, b2


if __name__ == "__main__":
    # Pendulum-v1 observation dim is 3; small online-inference batch.
    n_states = 3
    batch = 8

    key = jax.random.PRNGKey(0)
    key_x, key_p = jax.random.split(key)
    x = jax.random.normal(key_x, (batch, n_states), jnp.float32)
    w1, b1, w2, b2 = init_params(key_p, n_states)

    hp = jax.lax.Precision.HIGHEST

    def ref_fwd(xx):
        h = jnp.maximum(jnp.dot(xx, w1, precision=hp) + b1, 0.0)
        return jnp.dot(h, w2.reshape(HIDDEN, 1), precision=hp) + b2

    # 1) Pallas kernel, forced (no XLA fast path), exact f32 compute.
    v = jax.block_until_ready(
        critic_forward(x, w1, b1, w2, b2,
                       compute_dtype=jnp.float32, xla_fastpath_max_batch=0))
    assert v.shape == (batch, 1)
    assert jnp.allclose(v, ref_fwd(x), atol=1e-5, rtol=1e-5)

    # 2) Multi-tile (grid >= 2) ragged batch, auto compute dtype
    #    (bf16 FMAs with f32 accumulation on v6e/v7x, f32 elsewhere).
    batch2 = 1537
    x2 = jax.random.normal(jax.random.PRNGKey(1), (batch2, n_states), jnp.float32)
    v2 = jax.block_until_ready(critic_forward(x2, w1, b1, w2, b2))
    if _default_compute_dtype() == jnp.float32:
        tol = dict(atol=1e-5, rtol=1e-5)
    else:
        tol = dict(atol=5e-2, rtol=5e-2)   # bf16 compute path
    assert v2.shape == (batch2, 1)
    assert jnp.allclose(v2, ref_fwd(x2), **tol)

    # 3) Tiny-batch XLA fast path (default dispatch, B <= 128).
    v3 = jax.block_until_ready(critic_forward(x, w1, b1, w2, b2))
    assert v3.shape == (batch, 1)
    assert jnp.allclose(v3, ref_fwd(x), atol=1e-5, rtol=1e-5)

    print("KERNEL_OK")
</pallas_src>

<mosaic_0001>
module attributes {stable_mosaic.version = 11 : i64} {
  func.func @critic_kernel(%arg0: i32, %arg1: memref<8x128xf32, #tpu.memory_space<vmem>>, %arg2: memref<128x5xf32, #tpu.memory_space<vmem>>, %arg3: memref<1x1xf32, #tpu.memory_space<smem>>, %arg4: memref<1x128xf32, #tpu.memory_space<vmem>>) attributes {dimension_semantics = [#tpu.dimension_semantics<parallel>], iteration_bounds = array<i64: 1>, scalar_prefetch = 0 : i64, scratch_operands = 0 : i64, tpu.core_type = #tpu.core_type<tc>, window_params = [{transform_indices = @transform_0, window_bounds = array<i64: 8, 128>}, {pipeline_mode = #tpu.pipeline_mode<synchronous>, transform_indices = @transform_1, window_bounds = array<i64: 128, 5>}, {transform_indices = @transform_2, window_bounds = array<i64: 1, 1>}, {transform_indices = @transform_3, window_bounds = array<i64: 1, 128>}]} {
    %c0 = arith.constant 0 : index
    %c0_0 = arith.constant 0 : index
    %0 = vector.load %arg1[%c0, %c0_0] : memref<8x128xf32, #tpu.memory_space<vmem>>, vector<1x128xf32>
    %1 = vector.shape_cast %0 : vector<1x128xf32> to vector<1x128xf32>
    %2 = vector.broadcast %1 : vector<1x128xf32> to vector<8x128xf32>
    %c1 = arith.constant 1 : index
    %c0_1 = arith.constant 0 : index
    %3 = vector.load %arg1[%c1, %c0_1] : memref<8x128xf32, #tpu.memory_space<vmem>>, vector<1x128xf32>
    %4 = vector.shape_cast %3 : vector<1x128xf32> to vector<1x128xf32>
    %5 = vector.broadcast %4 : vector<1x128xf32> to vector<8x128xf32>
    %c2 = arith.constant 2 : index
    %c0_2 = arith.constant 0 : index
    %6 = vector.load %arg1[%c2, %c0_2] : memref<8x128xf32, #tpu.memory_space<vmem>>, vector<1x128xf32>
    %7 = vector.shape_cast %6 : vector<1x128xf32> to vector<1x128xf32>
    %8 = vector.broadcast %7 : vector<1x128xf32> to vector<8x128xf32>
    %cst = arith.constant 0.000000e+00 : f32
    %9 = vector.broadcast %cst : f32 to vector<8x128xf32>
    %c0_3 = arith.constant 0 : index
    %c0_4 = arith.constant 0 : index
    %10 = vector.load %arg2[%c0_3, %c0_4] : memref<128x5xf32, #tpu.memory_space<vmem>>, vector<8x5xf32>
    %11 = vector.extract_strided_slice %10 {offsets = [0, 0], sizes = [8, 1], strides = [1, 1]} : vector<8x5xf32> to vector<8x1xf32>
    %12 = vector.broadcast %11 : vector<8x1xf32> to vector<8x128xf32>
    %13 = arith.mulf %12, %2 : vector<8x128xf32>
    %14 = vector.extract_strided_slice %10 {offsets = [0, 1], sizes = [8, 1], strides = [1, 1]} : vector<8x5xf32> to vector<8x1xf32>
    %15 = vector.broadcast %14 : vector<8x1xf32> to vector<8x128xf32>
    %16 = arith.mulf %15, %5 : vector<8x128xf32>
    %17 = arith.addf %13, %16 : vector<8x128xf32>
    %18 = vector.extract_strided_slice %10 {offsets = [0, 2], sizes = [8, 1], strides = [1, 1]} : vector<8x5xf32> to vector<8x1xf32>
    %19 = vector.broadcast %18 : vector<8x1xf32> to vector<8x128xf32>
    %20 = arith.mulf %19, %8 : vector<8x128xf32>
    %21 = arith.addf %17, %20 : vector<8x128xf32>
    %22 = vector.extract_strided_slice %10 {offsets = [0, 3], sizes = [8, 1], strides = [1, 1]} : vector<8x5xf32> to vector<8x1xf32>
    %23 = vector.broadcast %22 : vector<8x1xf32> to vector<8x128xf32>
    %24 = arith.addf %21, %23 : vector<8x128xf32>
    %cst_5 = arith.constant 0.000000e+00 : f32
    %25 = vector.broadcast %cst_5 : f32 to vector<8x128xf32>
    %26 = arith.maximumf %24, %25 : vector<8x128xf32>
    %27 = vector.extract_strided_slice %10 {offsets = [0, 4], sizes = [8, 1], strides = [1, 1]} : vector<8x5xf32> to vector<8x1xf32>
    %28 = vector.broadcast %27 : vector<8x1xf32> to vector<8x128xf32>
    %29 = arith.mulf %26, %28 : vector<8x128xf32>
    %30 = arith.addf %9, %29 : vector<8x128xf32>
    %c8 = arith.constant 8 : index
    %c0_6 = arith.constant 0 : index
    %31 = vector.load %arg2[%c8, %c0_6] : memref<128x5xf32, #tpu.memory_space<vmem>>, vector<8x5xf32>
    %32 = vector.extract_strided_slice %31 {offsets = [0, 0], sizes = [8, 1], strides = [1, 1]} : vector<8x5xf32> to vector<8x1xf32>
    %33 = vector.broadcast %32 : vector<8x1xf32> to vector<8x128xf32>
    %34 = arith.mulf %33, %2 : vector<8x128xf32>
    %35 = vector.extract_strided_slice %31 {offsets = [0, 1], sizes = [8, 1], strides = [1, 1]} : vector<8x5xf32> to vector<8x1xf32>
    %36 = vector.broadcast %35 : vector<8x1xf32> to vector<8x128xf32>
    %37 = arith.mulf %36, %5 : vector<8x128xf32>
    %38 = arith.addf %34, %37 : vector<8x128xf32>
    %39 = vector.extract_strided_slice %31 {offsets = [0, 2], sizes = [8, 1], strides = [1, 1]} : vector<8x5xf32> to vector<8x1xf32>
    %40 = vector.broadcast %39 : vector<8x1xf32> to vector<8x128xf32>
    %41 = arith.mulf %40, %8 : vector<8x128xf32>
    %42 = arith.addf %38, %41 : vector<8x128xf32>
    %43 = vector.extract_strided_slice %31 {offsets = [0, 3], sizes = [8, 1], strides = [1, 1]} : vector<8x5xf32> to vector<8x1xf32>
    %44 = vector.broadcast %43 : vector<8x1xf32> to vector<8x128xf32>
    %45 = arith.addf %42, %44 : vector<8x128xf32>
    %cst_7 = arith.constant 0.000000e+00 : f32
    %46 = vector.broadcast %cst_7 : f32 to vector<8x128xf32>
    %47 = arith.maximumf %45, %46 : vector<8x128xf32>
    %48 = vector.extract_strided_slice %31 {offsets = [0, 4], sizes = [8, 1], strides = [1, 1]} : vector<8x5xf32> to vector<8x1xf32>
    %49 = vector.broadcast %48 : vector<8x1xf32> to vector<8x128xf32>
    %50 = arith.mulf %47, %49 : vector<8x128xf32>
    %51 = arith.addf %30, %50 : vector<8x128xf32>
    %c16 = arith.constant 16 : index
    %c0_8 = arith.constant 0 : index
    %52 = vector.load %arg2[%c16, %c0_8] : memref<128x5xf32, #tpu.memory_space<vmem>>, vector<8x5xf32>
    %53 = vector.extract_strided_slice %52 {offsets = [0, 0], sizes = [8, 1], strides = [1, 1]} : vector<8x5xf32> to vector<8x1xf32>
    %54 = vector.broadcast %53 : vector<8x1xf32> to vector<8x128xf32>
    %55 = arith.mulf %54, %2 : vector<8x128xf32>
    %56 = vector.extract_strided_slice %52 {offsets = [0, 1], sizes = [8, 1], strides = [1, 1]} : vector<8x5xf32> to vector<8x1xf32>
    %57 = vector.broadcast %56 : vector<8x1xf32> to vector<8x128xf32>
    %58 = arith.mulf %57, %5 : vector<8x128xf32>
    %59 = arith.addf %55, %58 : vector<8x128xf32>
    %60 = vector.extract_strided_slice %52 {offsets = [0, 2], sizes = [8, 1], strides = [1, 1]} : vector<8x5xf32> to vector<8x1xf32>
    %61 = vector.broadcast %60 : vector<8x1xf32> to vector<8x128xf32>
    %62 = arith.mulf %61, %8 : vector<8x128xf32>
    %63 = arith.addf %59, %62 : vector<8x128xf32>
    %64 = vector.extract_strided_slice %52 {offsets = [0, 3], sizes = [8, 1], strides = [1, 1]} : vector<8x5xf32> to vector<8x1xf32>
    %65 = vector.broadcast %64 : vector<8x1xf32> to vector<8x128xf32>
    %66 = arith.addf %63, %65 : vector<8x128xf32>
    %cst_9 = arith.constant 0.000000e+00 : f32
    %67 = vector.broadcast %cst_9 : f32 to vector<8x128xf32>
    %68 = arith.maximumf %66, %67 : vector<8x128xf32>
    %69 = vector.extract_strided_slice %52 {offsets = [0, 4], sizes = [8, 1], strides = [1, 1]} : vector<8x5xf32> to vector<8x1xf32>
    %70 = vector.broadcast %69 : vector<8x1xf32> to vector<8x128xf32>
    %71 = arith.mulf %68, %70 : vector<8x128xf32>
    %72 = arith.addf %51, %71 : vector<8x128xf32>
    %c24 = arith.constant 24 : index
    %c0_10 = arith.constant 0 : index
    %73 = vector.load %arg2[%c24, %c0_10] : memref<128x5xf32, #tpu.memory_space<vmem>>, vector<8x5xf32>
    %74 = vector.extract_strided_slice %73 {offsets = [0, 0], sizes = [8, 1], strides = [1, 1]} : vector<8x5xf32> to vector<8x1xf32>
    %75 = vector.broadcast %74 : vector<8x1xf32> to vector<8x128xf32>
    %76 = arith.mulf %75, %2 : vector<8x128xf32>
    %77 = vector.extract_strided_slice %73 {offsets = [0, 1], sizes = [8, 1], strides = [1, 1]} : vector<8x5xf32> to vector<8x1xf32>
    %78 = vector.broadcast %77 : vector<8x1xf32> to vector<8x128xf32>
    %79 = arith.mulf %78, %5 : vector<8x128xf32>
    %80 = arith.addf %76, %79 : vector<8x128xf32>
    %81 = vector.extract_strided_slice %73 {offsets = [0, 2], sizes = [8, 1], strides = [1, 1]} : vector<8x5xf32> to vector<8x1xf32>
    %82 = vector.broadcast %81 : vector<8x1xf32> to vector<8x128xf32>
    %83 = arith.mulf %82, %8 : vector<8x128xf32>
    %84 = arith.addf %80, %83 : vector<8x128xf32>
    %85 = vector.extract_strided_slice %73 {offsets = [0, 3], sizes = [8, 1], strides = [1, 1]} : vector<8x5xf32> to vector<8x1xf32>
    %86 = vector.broadcast %85 : vector<8x1xf32> to vector<8x128xf32>
    %87 = arith.addf %84, %86 : vector<8x128xf32>
    %cst_11 = arith.constant 0.000000e+00 : f32
    %88 = vector.broadcast %cst_11 : f32 to vector<8x128xf32>
    %89 = arith.maximumf %87, %88 : vector<8x128xf32>
    %90 = vector.extract_strided_slice %73 {offsets = [0, 4], sizes = [8, 1], strides = [1, 1]} : vector<8x5xf32> to vector<8x1xf32>
    %91 = vector.broadcast %90 : vector<8x1xf32> to vector<8x128xf32>
    %92 = arith.mulf %89, %91 : vector<8x128xf32>
    %93 = arith.addf %72, %92 : vector<8x128xf32>
    %c32 = arith.constant 32 : index
    %c0_12 = arith.constant 0 : index
    %94 = vector.load %arg2[%c32, %c0_12] : memref<128x5xf32, #tpu.memory_space<vmem>>, vector<8x5xf32>
    %95 = vector.extract_strided_slice %94 {offsets = [0, 0], sizes = [8, 1], strides = [1, 1]} : vector<8x5xf32> to vector<8x1xf32>
    %96 = vector.broadcast %95 : vector<8x1xf32> to vector<8x128xf32>
    %97 = arith.mulf %96, %2 : vector<8x128xf32>
    %98 = vector.extract_strided_slice %94 {offsets = [0, 1], sizes = [8, 1], strides = [1, 1]} : vector<8x5xf32> to vector<8x1xf32>
    %99 = vector.broadcast %98 : vector<8x1xf32> to vector<8x128xf32>
    %100 = arith.mulf %99, %5 : vector<8x128xf32>
    %101 = arith.addf %97, %100 : vector<8x128xf32>
    %102 = vector.extract_strided_slice %94 {offsets = [0, 2], sizes = [8, 1], strides = [1, 1]} : vector<8x5xf32> to vector<8x1xf32>
    %103 = vector.broadcast %102 : vector<8x1xf32> to vector<8x128xf32>
    %104 = arith.mulf %103, %8 : vector<8x128xf32>
    %105 = arith.addf %101, %104 : vector<8x128xf32>
    %106 = vector.extract_strided_slice %94 {offsets = [0, 3], sizes = [8, 1], strides = [1, 1]} : vector<8x5xf32> to vector<8x1xf32>
    %107 = vector.broadcast %106 : vector<8x1xf32> to vector<8x128xf32>
    %108 = arith.addf %105, %107 : vector<8x128xf32>
    %cst_13 = arith.constant 0.000000e+00 : f32
    %109 = vector.broadcast %cst_13 : f32 to vector<8x128xf32>
    %110 = arith.maximumf %108, %109 : vector<8x128xf32>
    %111 = vector.extract_strided_slice %94 {offsets = [0, 4], sizes = [8, 1], strides = [1, 1]} : vector<8x5xf32> to vector<8x1xf32>
    %112 = vector.broadcast %111 : vector<8x1xf32> to vector<8x128xf32>
    %113 = arith.mulf %110, %112 : vector<8x128xf32>
    %114 = arith.addf %93, %113 : vector<8x128xf32>
    %c40 = arith.constant 40 : index
    %c0_14 = arith.constant 0 : index
    %115 = vector.load %arg2[%c40, %c0_14] : memref<128x5xf32, #tpu.memory_space<vmem>>, vector<8x5xf32>
    %116 = vector.extract_strided_slice %115 {offsets = [0, 0], sizes = [8, 1], strides = [1, 1]} : vector<8x5xf32> to vector<8x1xf32>
    %117 = vector.broadcast %116 : vector<8x1xf32> to vector<8x128xf32>
    %118 = arith.mulf %117, %2 : vector<8x128xf32>
    %119 = vector.extract_strided_slice %115 {offsets = [0, 1], sizes = [8, 1], strides = [1, 1]} : vector<8x5xf32> to vector<8x1xf32>
    %120 = vector.broadcast %119 : vector<8x1xf32> to vector<8x128xf32>
    %121 = arith.mulf %120, %5 : vector<8x128xf32>
    %122 = arith.addf %118, %121 : vector<8x128xf32>
    %123 = vector.extract_strided_slice %115 {offsets = [0, 2], sizes = [8, 1], strides = [1, 1]} : vector<8x5xf32> to vector<8x1xf32>
    %124 = vector.broadcast %123 : vector<8x1xf32> to vector<8x128xf32>
    %125 = arith.mulf %124, %8 : vector<8x128xf32>
    %126 = arith.addf %122, %125 : vector<8x128xf32>
    %127 = vector.extract_strided_slice %115 {offsets = [0, 3], sizes = [8, 1], strides = [1, 1]} : vector<8x5xf32> to vector<8x1xf32>
    %128 = vector.broadcast %127 : vector<8x1xf32> to vector<8x128xf32>
    %129 = arith.addf %126, %128 : vector<8x128xf32>
    %cst_15 = arith.constant 0.000000e+00 : f32
    %130 = vector.broadcast %cst_15 : f32 to vector<8x128xf32>
    %131 = arith.maximumf %129, %130 : vector<8x128xf32>
    %132 = vector.extract_strided_slice %115 {offsets = [0, 4], sizes = [8, 1], strides = [1, 1]} : vector<8x5xf32> to vector<8x1xf32>
    %133 = vector.broadcast %132 : vector<8x1xf32> to vector<8x128xf32>
    %134 = arith.mulf %131, %133 : vector<8x128xf32>
    %135 = arith.addf %114, %134 : vector<8x128xf32>
    %c48 = arith.constant 48 : index
    %c0_16 = arith.constant 0 : index
    %136 = vector.load %arg2[%c48, %c0_16] : memref<128x5xf32, #tpu.memory_space<vmem>>, vector<8x5xf32>
    %137 = vector.extract_strided_slice %136 {offsets = [0, 0], sizes = [8, 1], strides = [1, 1]} : vector<8x5xf32> to vector<8x1xf32>
    %138 = vector.broadcast %137 : vector<8x1xf32> to vector<8x128xf32>
    %139 = arith.mulf %138, %2 : vector<8x128xf32>
    %140 = vector.extract_strided_slice %136 {offsets = [0, 1], sizes = [8, 1], strides = [1, 1]} : vector<8x5xf32> to vector<8x1xf32>
    %141 = vector.broadcast %140 : vector<8x1xf32> to vector<8x128xf32>
    %142 = arith.mulf %141, %5 : vector<8x128xf32>
    %143 = arith.addf %139, %142 : vector<8x128xf32>
    %144 = vector.extract_strided_slice %136 {offsets = [0, 2], sizes = [8, 1], strides = [1, 1]} : vector<8x5xf32> to vector<8x1xf32>
    %145 = vector.broadcast %144 : vector<8x1xf32> to vector<8x128xf32>
    %146 = arith.mulf %145, %8 : vector<8x128xf32>
    %147 = arith.addf %143, %146 : vector<8x128xf32>
    %148 = vector.extract_strided_slice %136 {offsets = [0, 3], sizes = [8, 1], strides = [1, 1]} : vector<8x5xf32> to vector<8x1xf32>
    %149 = vector.broadcast %148 : vector<8x1xf32> to vector<8x128xf32>
    %150 = arith.addf %147, %149 : vector<8x128xf32>
    %cst_17 = arith.constant 0.000000e+00 : f32
    %151 = vector.broadcast %cst_17 : f32 to vector<8x128xf32>
    %152 = arith.maximumf %150, %151 : vector<8x128xf32>
    %153 = vector.extract_strided_slice %136 {offsets = [0, 4], sizes = [8, 1], strides = [1, 1]} : vector<8x5xf32> to vector<8x1xf32>
    %154 = vector.broadcast %153 : vector<8x1xf32> to vector<8x128xf32>
    %155 = arith.mulf %152, %154 : vector<8x128xf32>
    %156 = arith.addf %135, %155 : vector<8x128xf32>
    %c56 = arith.constant 56 : index
    %c0_18 = arith.constant 0 : index
    %157 = vector.load %arg2[%c56, %c0_18] : memref<128x5xf32, #tpu.memory_space<vmem>>, vector<8x5xf32>
    %158 = vector.extract_strided_slice %157 {offsets = [0, 0], sizes = [8, 1], strides = [1, 1]} : vector<8x5xf32> to vector<8x1xf32>
    %159 = vector.broadcast %158 : vector<8x1xf32> to vector<8x128xf32>
    %160 = arith.mulf %159, %2 : vector<8x128xf32>
    %161 = vector.extract_strided_slice %157 {offsets = [0, 1], sizes = [8, 1], strides = [1, 1]} : vector<8x5xf32> to vector<8x1xf32>
    %162 = vector.broadcast %161 : vector<8x1xf32> to vector<8x128xf32>
    %163 = arith.mulf %162, %5 : vector<8x128xf32>
    %164 = arith.addf %160, %163 : vector<8x128xf32>
    %165 = vector.extract_strided_slice %157 {offsets = [0, 2], sizes = [8, 1], strides = [1, 1]} : vector<8x5xf32> to vector<8x1xf32>
    %166 = vector.broadcast %165 : vector<8x1xf32> to vector<8x128xf32>
    %167 = arith.mulf %166, %8 : vector<8x128xf32>
    %168 = arith.addf %164, %167 : vector<8x128xf32>
    %169 = vector.extract_strided_slice %157 {offsets = [0, 3], sizes = [8, 1], strides = [1, 1]} : vector<8x5xf32> to vector<8x1xf32>
    %170 = vector.broadcast %169 : vector<8x1xf32> to vector<8x128xf32>
    %171 = arith.addf %168, %170 : vector<8x128xf32>
    %cst_19 = arith.constant 0.000000e+00 : f32
    %172 = vector.broadcast %cst_19 : f32 to vector<8x128xf32>
    %173 = arith.maximumf %171, %172 : vector<8x128xf32>
    %174 = vector.extract_strided_slice %157 {offsets = [0, 4], sizes = [8, 1], strides = [1, 1]} : vector<8x5xf32> to vector<8x1xf32>
    %175 = vector.broadcast %174 : vector<8x1xf32> to vector<8x128xf32>
    %176 = arith.mulf %173, %175 : vector<8x128xf32>
    %177 = arith.addf %156, %176 : vector<8x128xf32>
    %c64 = arith.constant 64 : index
    %c0_20 = arith.constant 0 : index
    %178 = vector.load %arg2[%c64, %c0_20] : memref<128x5xf32, #tpu.memory_space<vmem>>, vector<8x5xf32>
    %179 = vector.extract_strided_slice %178 {offsets = [0, 0], sizes = [8, 1], strides = [1, 1]} : vector<8x5xf32> to vector<8x1xf32>
    %180 = vector.broadcast %179 : vector<8x1xf32> to vector<8x128xf32>
    %181 = arith.mulf %180, %2 : vector<8x128xf32>
    %182 = vector.extract_strided_slice %178 {offsets = [0, 1], sizes = [8, 1], strides = [1, 1]} : vector<8x5xf32> to vector<8x1xf32>
    %183 = vector.broadcast %182 : vector<8x1xf32> to vector<8x128xf32>
    %184 = arith.mulf %183, %5 : vector<8x128xf32>
    %185 = arith.addf %181, %184 : vector<8x128xf32>
    %186 = vector.extract_strided_slice %178 {offsets = [0, 2], sizes = [8, 1], strides = [1, 1]} : vector<8x5xf32> to vector<8x1xf32>
    %187 = vector.broadcast %186 : vector<8x1xf32> to vector<8x128xf32>
    %188 = arith.mulf %187, %8 : vector<8x128xf32>
    %189 = arith.addf %185, %188 : vector<8x128xf32>
    %190 = vector.extract_strided_slice %178 {offsets = [0, 3], sizes = [8, 1], strides = [1, 1]} : vector<8x5xf32> to vector<8x1xf32>
    %191 = vector.broadcast %190 : vector<8x1xf32> to vector<8x128xf32>
    %192 = arith.addf %189, %191 : vector<8x128xf32>
    %cst_21 = arith.constant 0.000000e+00 : f32
    %193 = vector.broadcast %cst_21 : f32 to vector<8x128xf32>
    %194 = arith.maximumf %192, %193 : vector<8x128xf32>
    %195 = vector.extract_strided_slice %178 {offsets = [0, 4], sizes = [8, 1], strides = [1, 1]} : vector<8x5xf32> to vector<8x1xf32>
    %196 = vector.broadcast %195 : vector<8x1xf32> to vector<8x128xf32>
    %197 = arith.mulf %194, %196 : vector<8x128xf32>
    %198 = arith.addf %177, %197 : vector<8x128xf32>
    %c72 = arith.constant 72 : index
    %c0_22 = arith.constant 0 : index
    %199 = vector.load %arg2[%c72, %c0_22] : memref<128x5xf32, #tpu.memory_space<vmem>>, vector<8x5xf32>
    %200 = vector.extract_strided_slice %199 {offsets = [0, 0], sizes = [8, 1], strides = [1, 1]} : vector<8x5xf32> to vector<8x1xf32>
    %201 = vector.broadcast %200 : vector<8x1xf32> to vector<8x128xf32>
    %202 = arith.mulf %201, %2 : vector<8x128xf32>
    %203 = vector.extract_strided_slice %199 {offsets = [0, 1], sizes = [8, 1], strides = [1, 1]} : vector<8x5xf32> to vector<8x1xf32>
    %204 = vector.broadcast %203 : vector<8x1xf32> to vector<8x128xf32>
    %205 = arith.mulf %204, %5 : vector<8x128xf32>
    %206 = arith.addf %202, %205 : vector<8x128xf32>
    %207 = vector.extract_strided_slice %199 {offsets = [0, 2], sizes = [8, 1], strides = [1, 1]} : vector<8x5xf32> to vector<8x1xf32>
    %208 = vector.broadcast %207 : vector<8x1xf32> to vector<8x128xf32>
    %209 = arith.mulf %208, %8 : vector<8x128xf32>
    %210 = arith.addf %206, %209 : vector<8x128xf32>
    %211 = vector.extract_strided_slice %199 {offsets = [0, 3], sizes = [8, 1], strides = [1, 1]} : vector<8x5xf32> to vector<8x1xf32>
    %212 = vector.broadcast %211 : vector<8x1xf32> to vector<8x128xf32>
    %213 = arith.addf %210, %212 : vector<8x128xf32>
    %cst_23 = arith.constant 0.000000e+00 : f32
    %214 = vector.broadcast %cst_23 : f32 to vector<8x128xf32>
    %215 = arith.maximumf %213, %214 : vector<8x128xf32>
    %216 = vector.extract_strided_slice %199 {offsets = [0, 4], sizes = [8, 1], strides = [1, 1]} : vector<8x5xf32> to vector<8x1xf32>
    %217 = vector.broadcast %216 : vector<8x1xf32> to vector<8x128xf32>
    %218 = arith.mulf %215, %217 : vector<8x128xf32>
    %219 = arith.addf %198, %218 : vector<8x128xf32>
    %c80 = arith.constant 80 : index
    %c0_24 = arith.constant 0 : index
    %220 = vector.load %arg2[%c80, %c0_24] : memref<128x5xf32, #tpu.memory_space<vmem>>, vector<8x5xf32>
    %221 = vector.extract_strided_slice %220 {offsets = [0, 0], sizes = [8, 1], strides = [1, 1]} : vector<8x5xf32> to vector<8x1xf32>
    %222 = vector.broadcast %221 : vector<8x1xf32> to vector<8x128xf32>
    %223 = arith.mulf %222, %2 : vector<8x128xf32>
    %224 = vector.extract_strided_slice %220 {offsets = [0, 1], sizes = [8, 1], strides = [1, 1]} : vector<8x5xf32> to vector<8x1xf32>
    %225 = vector.broadcast %224 : vector<8x1xf32> to vector<8x128xf32>
    %226 = arith.mulf %225, %5 : vector<8x128xf32>
    %227 = arith.addf %223, %226 : vector<8x128xf32>
    %228 = vector.extract_strided_slice %220 {offsets = [0, 2], sizes = [8, 1], strides = [1, 1]} : vector<8x5xf32> to vector<8x1xf32>
    %229 = vector.broadcast %228 : vector<8x1xf32> to vector<8x128xf32>
    %230 = arith.mulf %229, %8 : vector<8x128xf32>
    %231 = arith.addf %227, %230 : vector<8x128xf32>
    %232 = vector.extract_strided_slice %220 {offsets = [0, 3], sizes = [8, 1], strides = [1, 1]} : vector<8x5xf32> to vector<8x1xf32>
    %233 = vector.broadcast %232 : vector<8x1xf32> to vector<8x128xf32>
    %234 = arith.addf %231, %233 : vector<8x128xf32>
    %cst_25 = arith.constant 0.000000e+00 : f32
    %235 = vector.broadcast %cst_25 : f32 to vector<8x128xf32>
    %236 = arith.maximumf %234, %235 : vector<8x128xf32>
    %237 = vector.extract_strided_slice %220 {offsets = [0, 4], sizes = [8, 1], strides = [1, 1]} : vector<8x5xf32> to vector<8x1xf32>
    %238 = vector.broadcast %237 : vector<8x1xf32> to vector<8x128xf32>
    %239 = arith.mulf %236, %238 : vector<8x128xf32>
    %240 = arith.addf %219, %239 : vector<8x128xf32>
    %c88 = arith.constant 88 : index
    %c0_26 = arith.constant 0 : index
    %241 = vector.load %arg2[%c88, %c0_26] : memref<128x5xf32, #tpu.memory_space<vmem>>, vector<8x5xf32>
    %242 = vector.extract_strided_slice %241 {offsets = [0, 0], sizes = [8, 1], strides = [1, 1]} : vector<8x5xf32> to vector<8x1xf32>
    %243 = vector.broadcast %242 : vector<8x1xf32> to vector<8x128xf32>
    %244 = arith.mulf %243, %2 : vector<8x128xf32>
    %245 = vector.extract_strided_slice %241 {offsets = [0, 1], sizes = [8, 1], strides = [1, 1]} : vector<8x5xf32> to vector<8x1xf32>
    %246 = vector.broadcast %245 : vector<8x1xf32> to vector<8x128xf32>
    %247 = arith.mulf %246, %5 : vector<8x128xf32>
    %248 = arith.addf %244, %247 : vector<8x128xf32>
    %249 = vector.extract_strided_slice %241 {offsets = [0, 2], sizes = [8, 1], strides = [1, 1]} : vector<8x5xf32> to vector<8x1xf32>
    %250 = vector.broadcast %249 : vector<8x1xf32> to vector<8x128xf32>
    %251 = arith.mulf %250, %8 : vector<8x128xf32>
    %252 = arith.addf %248, %251 : vector<8x128xf32>
    %253 = vector.extract_strided_slice %241 {offsets = [0, 3], sizes = [8, 1], strides = [1, 1]} : vector<8x5xf32> to vector<8x1xf32>
    %254 = vector.broadcast %253 : vector<8x1xf32> to vector<8x128xf32>
    %255 = arith.addf %252, %254 : vector<8x128xf32>
    %cst_27 = arith.constant 0.000000e+00 : f32
    %256 = vector.broadcast %cst_27 : f32 to vector<8x128xf32>
    %257 = arith.maximumf %255, %256 : vector<8x128xf32>
    %258 = vector.extract_strided_slice %241 {offsets = [0, 4], sizes = [8, 1], strides = [1, 1]} : vector<8x5xf32> to vector<8x1xf32>
    %259 = vector.broadcast %258 : vector<8x1xf32> to vector<8x128xf32>
    %260 = arith.mulf %257, %259 : vector<8x128xf32>
    %261 = arith.addf %240, %260 : vector<8x128xf32>
    %c96 = arith.constant 96 : index
    %c0_28 = arith.constant 0 : index
    %262 = vector.load %arg2[%c96, %c0_28] : memref<128x5xf32, #tpu.memory_space<vmem>>, vector<8x5xf32>
    %263 = vector.extract_strided_slice %262 {offsets = [0, 0], sizes = [8, 1], strides = [1, 1]} : vector<8x5xf32> to vector<8x1xf32>
    %264 = vector.broadcast %263 : vector<8x1xf32> to vector<8x128xf32>
    %265 = arith.mulf %264, %2 : vector<8x128xf32>
    %266 = vector.extract_strided_slice %262 {offsets = [0, 1], sizes = [8, 1], strides = [1, 1]} : vector<8x5xf32> to vector<8x1xf32>
    %267 = vector.broadcast %266 : vector<8x1xf32> to vector<8x128xf32>
    %268 = arith.mulf %267, %5 : vector<8x128xf32>
    %269 = arith.addf %265, %268 : vector<8x128xf32>
    %270 = vector.extract_strided_slice %262 {offsets = [0, 2], sizes = [8, 1], strides = [1, 1]} : vector<8x5xf32> to vector<8x1xf32>
    %271 = vector.broadcast %270 : vector<8x1xf32> to vector<8x128xf32>
    %272 = arith.mulf %271, %8 : vector<8x128xf32>
    %273 = arith.addf %269, %272 : vector<8x128xf32>
    %274 = vector.extract_strided_slice %262 {offsets = [0, 3], sizes = [8, 1], strides = [1, 1]} : vector<8x5xf32> to vector<8x1xf32>
    %275 = vector.broadcast %274 : vector<8x1xf32> to vector<8x128xf32>
    %276 = arith.addf %273, %275 : vector<8x128xf32>
    %cst_29 = arith.constant 0.000000e+00 : f32
    %277 = vector.broadcast %cst_29 : f32 to vector<8x128xf32>
    %278 = arith.maximumf %276, %277 : vector<8x128xf32>
    %279 = vector.extract_strided_slice %262 {offsets = [0, 4], sizes = [8, 1], strides = [1, 1]} : vector<8x5xf32> to vector<8x1xf32>
    %280 = vector.broadcast %279 : vector<8x1xf32> to vector<8x128xf32>
    %281 = arith.mulf %278, %280 : vector<8x128xf32>
    %282 = arith.addf %261, %281 : vector<8x128xf32>
    %c104 = arith.constant 104 : index
    %c0_30 = arith.constant 0 : index
    %283 = vector.load %arg2[%c104, %c0_30] : memref<128x5xf32, #tpu.memory_space<vmem>>, vector<8x5xf32>
    %284 = vector.extract_strided_slice %283 {offsets = [0, 0], sizes = [8, 1], strides = [1, 1]} : vector<8x5xf32> to vector<8x1xf32>
    %285 = vector.broadcast %284 : vector<8x1xf32> to vector<8x128xf32>
    %286 = arith.mulf %285, %2 : vector<8x128xf32>
    %287 = vector.extract_strided_slice %283 {offsets = [0, 1], sizes = [8, 1], strides = [1, 1]} : vector<8x5xf32> to vector<8x1xf32>
    %288 = vector.broadcast %287 : vector<8x1xf32> to vector<8x128xf32>
    %289 = arith.mulf %288, %5 : vector<8x128xf32>
    %290 = arith.addf %286, %289 : vector<8x128xf32>
    %291 = vector.extract_strided_slice %283 {offsets = [0, 2], sizes = [8, 1], strides = [1, 1]} : vector<8x5xf32> to vector<8x1xf32>
    %292 = vector.broadcast %291 : vector<8x1xf32> to vector<8x128xf32>
    %293 = arith.mulf %292, %8 : vector<8x128xf32>
    %294 = arith.addf %290, %293 : vector<8x128xf32>
    %295 = vector.extract_strided_slice %283 {offsets = [0, 3], sizes = [8, 1], strides = [1, 1]} : vector<8x5xf32> to vector<8x1xf32>
    %296 = vector.broadcast %295 : vector<8x1xf32> to vector<8x128xf32>
    %297 = arith.addf %294, %296 : vector<8x128xf32>
    %cst_31 = arith.constant 0.000000e+00 : f32
    %298 = vector.broadcast %cst_31 : f32 to vector<8x128xf32>
    %299 = arith.maximumf %297, %298 : vector<8x128xf32>
    %300 = vector.extract_strided_slice %283 {offsets = [0, 4], sizes = [8, 1], strides = [1, 1]} : vector<8x5xf32> to vector<8x1xf32>
    %301 = vector.broadcast %300 : vector<8x1xf32> to vector<8x128xf32>
    %302 = arith.mulf %299, %301 : vector<8x128xf32>
    %303 = arith.addf %282, %302 : vector<8x128xf32>
    %c112 = arith.constant 112 : index
    %c0_32 = arith.constant 0 : index
    %304 = vector.load %arg2[%c112, %c0_32] : memref<128x5xf32, #tpu.memory_space<vmem>>, vector<8x5xf32>
    %305 = vector.extract_strided_slice %304 {offsets = [0, 0], sizes = [8, 1], strides = [1, 1]} : vector<8x5xf32> to vector<8x1xf32>
    %306 = vector.broadcast %305 : vector<8x1xf32> to vector<8x128xf32>
    %307 = arith.mulf %306, %2 : vector<8x128xf32>
    %308 = vector.extract_strided_slice %304 {offsets = [0, 1], sizes = [8, 1], strides = [1, 1]} : vector<8x5xf32> to vector<8x1xf32>
    %309 = vector.broadcast %308 : vector<8x1xf32> to vector<8x128xf32>
    %310 = arith.mulf %309, %5 : vector<8x128xf32>
    %311 = arith.addf %307, %310 : vector<8x128xf32>
    %312 = vector.extract_strided_slice %304 {offsets = [0, 2], sizes = [8, 1], strides = [1, 1]} : vector<8x5xf32> to vector<8x1xf32>
    %313 = vector.broadcast %312 : vector<8x1xf32> to vector<8x128xf32>
    %314 = arith.mulf %313, %8 : vector<8x128xf32>
    %315 = arith.addf %311, %314 : vector<8x128xf32>
    %316 = vector.extract_strided_slice %304 {offsets = [0, 3], sizes = [8, 1], strides = [1, 1]} : vector<8x5xf32> to vector<8x1xf32>
    %317 = vector.broadcast %316 : vector<8x1xf32> to vector<8x128xf32>
    %318 = arith.addf %315, %317 : vector<8x128xf32>
    %cst_33 = arith.constant 0.000000e+00 : f32
    %319 = vector.broadcast %cst_33 : f32 to vector<8x128xf32>
    %320 = arith.maximumf %318, %319 : vector<8x128xf32>
    %321 = vector.extract_strided_slice %304 {offsets = [0, 4], sizes = [8, 1], strides = [1, 1]} : vector<8x5xf32> to vector<8x1xf32>
    %322 = vector.broadcast %321 : vector<8x1xf32> to vector<8x128xf32>
    %323 = arith.mulf %320, %322 : vector<8x128xf32>
    %324 = arith.addf %303, %323 : vector<8x128xf32>
    %c120 = arith.constant 120 : index
    %c0_34 = arith.constant 0 : index
    %325 = vector.load %arg2[%c120, %c0_34] : memref<128x5xf32, #tpu.memory_space<vmem>>, vector<8x5xf32>
    %326 = vector.extract_strided_slice %325 {offsets = [0, 0], sizes = [8, 1], strides = [1, 1]} : vector<8x5xf32> to vector<8x1xf32>
    %327 = vector.broadcast %326 : vector<8x1xf32> to vector<8x128xf32>
    %328 = arith.mulf %327, %2 : vector<8x128xf32>
    %329 = vector.extract_strided_slice %325 {offsets = [0, 1], sizes = [8, 1], strides = [1, 1]} : vector<8x5xf32> to vector<8x1xf32>
    %330 = vector.broadcast %329 : vector<8x1xf32> to vector<8x128xf32>
    %331 = arith.mulf %330, %5 : vector<8x128xf32>
    %332 = arith.addf %328, %331 : vector<8x128xf32>
    %333 = vector.extract_strided_slice %325 {offsets = [0, 2], sizes = [8, 1], strides = [1, 1]} : vector<8x5xf32> to vector<8x1xf32>
    %334 = vector.broadcast %333 : vector<8x1xf32> to vector<8x128xf32>
    %335 = arith.mulf %334, %8 : vector<8x128xf32>
    %336 = arith.addf %332, %335 : vector<8x128xf32>
    %337 = vector.extract_strided_slice %325 {offsets = [0, 3], sizes = [8, 1], strides = [1, 1]} : vector<8x5xf32> to vector<8x1xf32>
    %338 = vector.broadcast %337 : vector<8x1xf32> to vector<8x128xf32>
    %339 = arith.addf %336, %338 : vector<8x128xf32>
    %cst_35 = arith.constant 0.000000e+00 : f32
    %340 = vector.broadcast %cst_35 : f32 to vector<8x128xf32>
    %341 = arith.maximumf %339, %340 : vector<8x128xf32>
    %342 = vector.extract_strided_slice %325 {offsets = [0, 4], sizes = [8, 1], strides = [1, 1]} : vector<8x5xf32> to vector<8x1xf32>
    %343 = vector.broadcast %342 : vector<8x1xf32> to vector<8x128xf32>
    %344 = arith.mulf %341, %343 : vector<8x128xf32>
    %345 = arith.addf %324, %344 : vector<8x128xf32>
    %cst_36 = arith.constant dense<0.000000e+00> : vector<128xf32>
    %346 = vector.multi_reduction <add>, %345, %cst_36 [0] : vector<8x128xf32> to vector<128xf32>
    %347 = vector.shape_cast %346 : vector<128xf32> to vector<1x128xf32>
    %c0_37 = arith.constant 0 : index
    %c0_38 = arith.constant 0 : index
    %348 = memref.load %arg3[%c0_37, %c0_38] : memref<1x1xf32, #tpu.memory_space<smem>>
    %349 = vector.broadcast %348 : f32 to vector<1x128xf32>
    %350 = arith.addf %347, %349 : vector<1x128xf32>
    %c0_39 = arith.constant 0 : index
    %c0_40 = arith.constant 0 : index
    %351 = vector.load %arg4[%c0_39, %c0_40] : memref<1x128xf32, #tpu.memory_space<vmem>>, vector<1x128xf32>
    tpu.vector_store %arg4[%c0_39, %c0_40], %350 {strides = array<i32>} : memref<1x128xf32, #tpu.memory_space<vmem>>, vector<1x128xf32>,
    return
  }
  func.func @transform_0(%arg0: i32) -> (i32, i32) {
    %c0_i32 = arith.constant 0 : i32
    %c0_i32_0 = arith.constant 0 : i32
    return %c0_i32, %arg0 : i32, i32
  }
  func.func @transform_1(%arg0: i32) -> (i32, i32) {
    %c0_i32 = arith.constant 0 : i32
    %c0_i32_0 = arith.constant 0 : i32
    %c0_i32_1 = arith.constant 0 : i32
    return %c0_i32, %c0_i32_0 : i32, i32
  }
  func.func @transform_2(%arg0: i32) -> (i32, i32) {
    %c0_i32 = arith.constant 0 : i32
    %c0_i32_0 = arith.constant 0 : i32
    %c0_i32_1 = arith.constant 0 : i32
    return %c0_i32, %c0_i32_0 : i32, i32
  }
  func.func @transform_3(%arg0: i32) -> (i32, i32) {
    %c0_i32 = arith.constant 0 : i32
    %c0_i32_0 = arith.constant 0 : i32
    return %c0_i32, %arg0 : i32, i32
  }
}

</mosaic_0001>

<llo_original>
// kernel: tpu_custom_call.1
$region0: #{tpu_custom_call.1}
  #allocation0 [shape = 'u32[]', space=smem, size = 0x4, offset = 0x4, fixed_abs, tag = 'smem constant byte address 0x4 - core index']
  #allocation1 [shape = 'u32[72,128]{1,0:T(1,128)}', space=vmem, size = 0x9000, scoped, tag = 'internal scratch']
  #allocation2 [shape = 'f32[1,1]{1,0:T(1,128)S(6)}', space=smem, size = 0x200, scoped, tag = 'scoped memory for tpu_custom_call.1']
  %s0 = inlined_call_operand.vmem [shape: f32[8,128], index: 0, kind: input, shape index: {}]
  %s1 = inlined_call_operand.vmem [shape: f32[128,5], index: 1, kind: input, shape index: {}]
  %s2 = inlined_call_operand.<no memory space> [shape: f32[1,1], index: 2, kind: input, shape index: {}]
  %s3 = inlined_call_operand.hbm [shape: f32[1,128], index: 3, kind: output, shape index: {}]
  %s4 = sld [smem:[#allocation0]]
  $region22: #{tpu_custom_call.1} parent=0
    _
  %s6 = ssub.s32 1, %s4
  %s7 = scalar_select 0, %s6, %s4
  %8 = sst [smem:[#allocation2]] %s2
  $region1: #{tpu_custom_call.1} parent=0
    #allocation3 [shape = 'u8[512]{0}', space=vmem, size = 0x400, scoped, tag = 'output window, operand 0, single buffered']
    #allocation4 [shape = 's32[1]{0}', space=sflag, size = 0x4, scoped, tag = 'scoped memory for tpu_custom_call.1']
    %9 = vsyncpa [#allocation4], 0
    // Predicated region
    $region2: #{tpu_custom_call.1} parent=1 // pred_check
      _
    $region3: #{tpu_custom_call.1} parent=1 // pred_check_branch
      %11 = sbr.rel (0) target = $region5
    $region4: #{tpu_custom_call.1} parent=1 // pred_region
      _
    $region5: #{tpu_custom_call.1} parent=1 // pred_fallthru
      _
    // Predicated region
    $region6: #{tpu_custom_call.1} parent=1 // pred_check
      _
    $region7: #{tpu_custom_call.1} parent=1 // pred_check_branch
      %13 = sbr.rel (0) target = $region9
    $region8: #{tpu_custom_call.1} parent=1 // pred_region
      _
    $region9: #{tpu_custom_call.1} parent=1 // pred_fallthru
      _
    // Predicated region
    $region10: #{tpu_custom_call.1} parent=1 // pred_check
      _
    $region11: #{tpu_custom_call.1} parent=1 // pred_check_branch
      %15 = sbr.rel (0) target = $region13
    $region12: #{tpu_custom_call.1} parent=1 // pred_region
      _
    $region13: #{tpu_custom_call.1} parent=1 // pred_fallthru
      _
    %v16 = vld [vmem:[%s0] sm:$0x1]
    %v17 = vperm.slane %v16, 0
    %v18 = vld [vmem:[%s0 + $0x1] sm:$0x1]
    %v19 = vperm.slane %v18, 0
    %v20 = vld [vmem:[%s0 + $0x2] sm:$0x1]
    %v21 = vperm.slane %v20, 0
    %v22 = vld [vmem:[%s1] sm:$0xff]
    %24 = vset.pattern.permute.xlu0 0
    %25 = vperm.xlu0 %24, %v22
    %v26 = vpop.permute.xlu0 %25
    %v28 = vmul.f32 %v26, %v17
    %29 = vset.pattern.permute.xlu0 1
    %30 = vperm.xlu0 %29, %v22
    %v31 = vpop.permute.xlu0 %30
    %v33 = vmul.f32 %v31, %v19
    %v34 = vadd.f32 %v28, %v33
    %35 = vset.pattern.permute.xlu0 2
    %36 = vperm.xlu0 %35, %v22
    %v37 = vpop.permute.xlu0 %36
    %v39 = vmul.f32 %v37, %v21
    %v40 = vadd.f32 %v34, %v39
    %41 = vset.pattern.permute.xlu0 3
    %42 = vperm.xlu0 %41, %v22
    %v43 = vpop.permute.xlu0 %42
    %v45 = vadd.f32 %v40, %v43
    %v46 = vmax.f32 %v45, 0.0
    %47 = vset.pattern.permute.xlu0 4
    %48 = vperm.xlu0 %47, %v22
    %v49 = vpop.permute.xlu0 %48
    %v51 = vmul.f32 %v46, %v49
    %v52 = vadd.f32 %v51, 0.0
    %v53 = vld [vmem:[%s1 + $0x8] sm:$0xff]
    %55 = vset.pattern.permute.xlu0 0
    %56 = vperm.xlu0 %55, %v53
    %v57 = vpop.permute.xlu0 %56
    %v59 = vmul.f32 %v57, %v17
    %60 = vset.pattern.permute.xlu0 1
    %61 = vperm.xlu0 %60, %v53
    %v62 = vpop.permute.xlu0 %61
    %v64 = vmul.f32 %v62, %v19
    %v65 = vadd.f32 %v59, %v64
    %66 = vset.pattern.permute.xlu0 2
    %67 = vperm.xlu0 %66, %v53
    %v68 = vpop.permute.xlu0 %67
    %v70 = vmul.f32 %v68, %v21
    %v71 = vadd.f32 %v65, %v70
    %72 = vset.pattern.permute.xlu0 3
    %73 = vperm.xlu0 %72, %v53
    %v74 = vpop.permute.xlu0 %73
    %v76 = vadd.f32 %v71, %v74
    %v77 = vmax.f32 %v76, 0.0
    %78 = vset.pattern.permute.xlu0 4
    %79 = vperm.xlu0 %78, %v53
    %v80 = vpop.permute.xlu0 %79
    %v82 = vmul.f32 %v77, %v80
    %v83 = vadd.f32 %v52, %v82
    %v84 = vld [vmem:[%s1 + $0x10] sm:$0xff]
    %86 = vset.pattern.permute.xlu0 0
    %87 = vperm.xlu0 %86, %v84
    %v88 = vpop.permute.xlu0 %87
    %v90 = vmul.f32 %v88, %v17
    %91 = vset.pattern.permute.xlu0 1
    %92 = vperm.xlu0 %91, %v84
    %v93 = vpop.permute.xlu0 %92
    %v95 = vmul.f32 %v93, %v19
    %v96 = vadd.f32 %v90, %v95
    %97 = vset.pattern.permute.xlu0 2
    %98 = vperm.xlu0 %97, %v84
    %v99 = vpop.permute.xlu0 %98
    %v101 = vmul.f32 %v99, %v21
    %v102 = vadd.f32 %v96, %v101
    %103 = vset.pattern.permute.xlu0 3
    %104 = vperm.xlu0 %103, %v84
    %v105 = vpop.permute.xlu0 %104
    %v107 = vadd.f32 %v102, %v105
    %v108 = vmax.f32 %v107, 0.0
    %109 = vset.pattern.permute.xlu0 4
    %110 = vperm.xlu0 %109, %v84
    %v111 = vpop.permute.xlu0 %110
    %v113 = vmul.f32 %v108, %v111
    %v114 = vadd.f32 %v83, %v113
    %v115 = vld [vmem:[%s1 + $0x18] sm:$0xff]
    %117 = vset.pattern.permute.xlu0 0
    %118 = vperm.xlu0 %117, %v115
    %v119 = vpop.permute.xlu0 %118
    %v121 = vmul.f32 %v119, %v17
    %122 = vset.pattern.permute.xlu0 1
    %123 = vperm.xlu0 %122, %v115
    %v124 = vpop.permute.xlu0 %123
    %v126 = vmul.f32 %v124, %v19
    %v127 = vadd.f32 %v121, %v126
    %128 = vset.pattern.permute.xlu0 2
    %129 = vperm.xlu0 %128, %v115
    %v130 = vpop.permute.xlu0 %129
    %v132 = vmul.f32 %v130, %v21
    %v133 = vadd.f32 %v127, %v132
    %134 = vset.pattern.permute.xlu0 3
    %135 = vperm.xlu0 %134, %v115
    %v136 = vpop.permute.xlu0 %135
    %v138 = vadd.f32 %v133, %v136
    %v139 = vmax.f32 %v138, 0.0
    %140 = vset.pattern.permute.xlu0 4
    %141 = vperm.xlu0 %140, %v115
    %v142 = vpop.permute.xlu0 %141
    %v144 = vmul.f32 %v139, %v142
    %v145 = vadd.f32 %v114, %v144
    %v146 = vld [vmem:[%s1 + $0x20] sm:$0xff]
    %148 = vset.pattern.permute.xlu0 0
    %149 = vperm.xlu0 %148, %v146
    %v150 = vpop.permute.xlu0 %149
    %v152 = vmul.f32 %v150, %v17
    %153 = vset.pattern.permute.xlu0 1
    %154 = vperm.xlu0 %153, %v146
    %v155 = vpop.permute.xlu0 %154
    %v157 = vmul.f32 %v155, %v19
    %v158 = vadd.f32 %v152, %v157
    %159 = vset.pattern.permute.xlu0 2
    %160 = vperm.xlu0 %159, %v146
    %v161 = vpop.permute.xlu0 %160
    %v163 = vmul.f32 %v161, %v21
    %v164 = vadd.f32 %v158, %v163
    %165 = vset.pattern.permute.xlu0 3
    %166 = vperm.xlu0 %165, %v146
    %v167 = vpop.permute.xlu0 %166
    %v169 = vadd.f32 %v164, %v167
    %v170 = vmax.f32 %v169, 0.0
    %171 = vset.pattern.permute.xlu0 4
    %172 = vperm.xlu0 %171, %v146
    %v173 = vpop.permute.xlu0 %172
    %v175 = vmul.f32 %v170, %v173
    %v176 = vadd.f32 %v145, %v175
    %v177 = vld [vmem:[%s1 + $0x28] sm:$0xff]
    %179 = vset.pattern.permute.xlu0 0
    %180 = vperm.xlu0 %179, %v177
    %v181 = vpop.permute.xlu0 %180
    %v183 = vmul.f32 %v181, %v17
    %184 = vset.pattern.permute.xlu0 1
    %185 = vperm.xlu0 %184, %v177
    %v186 = vpop.permute.xlu0 %185
    %v188 = vmul.f32 %v186, %v19
    %v189 = vadd.f32 %v183, %v188
    %190 = vset.pattern.permute.xlu0 2
    %191 = vperm.xlu0 %190, %v177
    %v192 = vpop.permute.xlu0 %191
    %v194 = vmul.f32 %v192, %v21
    %v195 = vadd.f32 %v189, %v194
    %196 = vset.pattern.permute.xlu0 3
    %197 = vperm.xlu0 %196, %v177
    %v198 = vpop.permute.xlu0 %197
    %v200 = vadd.f32 %v195, %v198
    %v201 = vmax.f32 %v200, 0.0
    %202 = vset.pattern.permute.xlu0 4
    %203 = vperm.xlu0 %202, %v177
    %v204 = vpop.permute.xlu0 %203
    %v206 = vmul.f32 %v201, %v204
    %v207 = vadd.f32 %v176, %v206
    %v208 = vld [vmem:[%s1 + $0x30] sm:$0xff]
    %210 = vset.pattern.permute.xlu0 0
    %211 = vperm.xlu0 %210, %v208
    %v212 = vpop.permute.xlu0 %211
    %v214 = vmul.f32 %v212, %v17
    %215 = vset.pattern.permute.xlu0 1
    %216 = vperm.xlu0 %215, %v208
    %v217 = vpop.permute.xlu0 %216
    %v219 = vmul.f32 %v217, %v19
    %v220 = vadd.f32 %v214, %v219
    %221 = vset.pattern.permute.xlu0 2
    %222 = vperm.xlu0 %221, %v208
    %v223 = vpop.permute.xlu0 %222
    %v225 = vmul.f32 %v223, %v21
    %v226 = vadd.f32 %v220, %v225
    %227 = vset.pattern.permute.xlu0 3
    %228 = vperm.xlu0 %227, %v208
    %v229 = vpop.permute.xlu0 %228
    %v231 = vadd.f32 %v226, %v229
    %v232 = vmax.f32 %v231, 0.0
    %233 = vset.pattern.permute.xlu0 4
    %234 = vperm.xlu0 %233, %v208
    %v235 = vpop.permute.xlu0 %234
    %v237 = vmul.f32 %v232, %v235
    %v238 = vadd.f32 %v207, %v237
    %v239 = vld [vmem:[%s1 + $0x38] sm:$0xff]
    %241 = vset.pattern.permute.xlu0 0
    %242 = vperm.xlu0 %241, %v239
    %v243 = vpop.permute.xlu0 %242
    %v245 = vmul.f32 %v243, %v17
    %246 = vset.pattern.permute.xlu0 1
    %247 = vperm.xlu0 %246, %v239
    %v248 = vpop.permute.xlu0 %247
    %v250 = vmul.f32 %v248, %v19
    %v251 = vadd.f32 %v245, %v250
    %252 = vset.pattern.permute.xlu0 2
    %253 = vperm.xlu0 %252, %v239
    %v254 = vpop.permute.xlu0 %253
    %v256 = vmul.f32 %v254, %v21
    %v257 = vadd.f32 %v251, %v256
    %258 = vset.pattern.permute.xlu0 3
    %259 = vperm.xlu0 %258, %v239
    %v260 = vpop.permute.xlu0 %259
    %v262 = vadd.f32 %v257, %v260
    %v263 = vmax.f32 %v262, 0.0
    %264 = vset.pattern.permute.xlu0 4
    %265 = vperm.xlu0 %264, %v239
    %v266 = vpop.permute.xlu0 %265
    %v268 = vmul.f32 %v263, %v266
    %v269 = vadd.f32 %v238, %v268
    %v270 = vld [vmem:[%s1 + $0x40] sm:$0xff]
    %272 = vset.pattern.permute.xlu0 0
    %273 = vperm.xlu0 %272, %v270
    %v274 = vpop.permute.xlu0 %273
    %v276 = vmul.f32 %v274, %v17
    %277 = vset.pattern.permute.xlu0 1
    %278 = vperm.xlu0 %277, %v270
    %v279 = vpop.permute.xlu0 %278
    %v281 = vmul.f32 %v279, %v19
    %v282 = vadd.f32 %v276, %v281
    %283 = vset.pattern.permute.xlu0 2
    %284 = vperm.xlu0 %283, %v270
    %v285 = vpop.permute.xlu0 %284
    %v287 = vmul.f32 %v285, %v21
    %v288 = vadd.f32 %v282, %v287
    %289 = vset.pattern.permute.xlu0 3
    %290 = vperm.xlu0 %289, %v270
    %v291 = vpop.permute.xlu0 %290
    %v293 = vadd.f32 %v288, %v291
    %v294 = vmax.f32 %v293, 0.0
    %295 = vset.pattern.permute.xlu0 4
    %296 = vperm.xlu0 %295, %v270
    %v297 = vpop.permute.xlu0 %296
    %v299 = vmul.f32 %v294, %v297
    %v300 = vadd.f32 %v269, %v299
    %v301 = vld [vmem:[%s1 + $0x48] sm:$0xff]
    %303 = vset.pattern.permute.xlu0 0
    %304 = vperm.xlu0 %303, %v301
    %v305 = vpop.permute.xlu0 %304
    %v307 = vmul.f32 %v305, %v17
    %308 = vset.pattern.permute.xlu0 1
    %309 = vperm.xlu0 %308, %v301
    %v310 = vpop.permute.xlu0 %309
    %v312 = vmul.f32 %v310, %v19
    %v313 = vadd.f32 %v307, %v312
    %314 = vset.pattern.permute.xlu0 2
    %315 = vperm.xlu0 %314, %v301
    %v316 = vpop.permute.xlu0 %315
    %v318 = vmul.f32 %v316, %v21
    %v319 = vadd.f32 %v313, %v318
    %320 = vset.pattern.permute.xlu0 3
    %321 = vperm.xlu0 %320, %v301
    %v322 = vpop.permute.xlu0 %321
    %v324 = vadd.f32 %v319, %v322
    %v325 = vmax.f32 %v324, 0.0
    %326 = vset.pattern.permute.xlu0 4
    %327 = vperm.xlu0 %326, %v301
    %v328 = vpop.permute.xlu0 %327
    %v330 = vmul.f32 %v325, %v328
    %v331 = vadd.f32 %v300, %v330
    %v332 = vld [vmem:[%s1 + $0x50] sm:$0xff]
    %334 = vset.pattern.permute.xlu0 0
    %335 = vperm.xlu0 %334, %v332
    %v336 = vpop.permute.xlu0 %335
    %v338 = vmul.f32 %v336, %v17
    %339 = vset.pattern.permute.xlu0 1
    %340 = vperm.xlu0 %339, %v332
    %v341 = vpop.permute.xlu0 %340
    %v343 = vmul.f32 %v341, %v19
    %v344 = vadd.f32 %v338, %v343
    %345 = vset.pattern.permute.xlu0 2
    %346 = vperm.xlu0 %345, %v332
    %v347 = vpop.permute.xlu0 %346
    %v349 = vmul.f32 %v347, %v21
    %v350 = vadd.f32 %v344, %v349
    %351 = vset.pattern.permute.xlu0 3
    %352 = vperm.xlu0 %351, %v332
    %v353 = vpop.permute.xlu0 %352
    %v355 = vadd.f32 %v350, %v353
    %v356 = vmax.f32 %v355, 0.0
    %357 = vset.pattern.permute.xlu0 4
    %358 = vperm.xlu0 %357, %v332
    %v359 = vpop.permute.xlu0 %358
    %v361 = vmul.f32 %v356, %v359
    %v362 = vadd.f32 %v331, %v361
    %v363 = vld [vmem:[%s1 + $0x58] sm:$0xff]
    %365 = vset.pattern.permute.xlu0 0
    %366 = vperm.xlu0 %365, %v363
    %v367 = vpop.permute.xlu0 %366
    %v369 = vmul.f32 %v367, %v17
    %370 = vset.pattern.permute.xlu0 1
    %371 = vperm.xlu0 %370, %v363
    %v372 = vpop.permute.xlu0 %371
    %v374 = vmul.f32 %v372, %v19
    %v375 = vadd.f32 %v369, %v374
    %376 = vset.pattern.permute.xlu0 2
    %377 = vperm.xlu0 %376, %v363
    %v378 = vpop.permute.xlu0 %377
    %v380 = vmul.f32 %v378, %v21
    %v381 = vadd.f32 %v375, %v380
    %382 = vset.pattern.permute.xlu0 3
    %383 = vperm.xlu0 %382, %v363
    %v384 = vpop.permute.xlu0 %383
    %v386 = vadd.f32 %v381, %v384
    %v387 = vmax.f32 %v386, 0.0
    %388 = vset.pattern.permute.xlu0 4
    %389 = vperm.xlu0 %388, %v363
    %v390 = vpop.permute.xlu0 %389
    %v392 = vmul.f32 %v387, %v390
    %v393 = vadd.f32 %v362, %v392
    %v394 = vld [vmem:[%s1 + $0x60] sm:$0xff]
    %396 = vset.pattern.permute.xlu0 0
    %397 = vperm.xlu0 %396, %v394
    %v398 = vpop.permute.xlu0 %397
    %v400 = vmul.f32 %v398, %v17
    %401 = vset.pattern.permute.xlu0 1
    %402 = vperm.xlu0 %401, %v394
    %v403 = vpop.permute.xlu0 %402
    %v405 = vmul.f32 %v403, %v19
    %v406 = vadd.f32 %v400, %v405
    %407 = vset.pattern.permute.xlu0 2
    %408 = vperm.xlu0 %407, %v394
    %v409 = vpop.permute.xlu0 %408
    %v411 = vmul.f32 %v409, %v21
    %v412 = vadd.f32 %v406, %v411
    %413 = vset.pattern.permute.xlu0 3
    %414 = vperm.xlu0 %413, %v394
    %v415 = vpop.permute.xlu0 %414
    %v417 = vadd.f32 %v412, %v415
    %v418 = vmax.f32 %v417, 0.0
    %419 = vset.pattern.permute.xlu0 4
    %420 = vperm.xlu0 %419, %v394
    %v421 = vpop.permute.xlu0 %420
    %v423 = vmul.f32 %v418, %v421
    %v424 = vadd.f32 %v393, %v423
    %v425 = vld [vmem:[%s1 + $0x68] sm:$0xff]
    %427 = vset.pattern.permute.xlu0 0
    %428 = vperm.xlu0 %427, %v425
    %v429 = vpop.permute.xlu0 %428
    %v431 = vmul.f32 %v429, %v17
    %432 = vset.pattern.permute.xlu0 1
    %433 = vperm.xlu0 %432, %v425
    %v434 = vpop.permute.xlu0 %433
    %v436 = vmul.f32 %v434, %v19
    %v437 = vadd.f32 %v431, %v436
    %438 = vset.pattern.permute.xlu0 2
    %439 = vperm.xlu0 %438, %v425
    %v440 = vpop.permute.xlu0 %439
    %v442 = vmul.f32 %v440, %v21
    %v443 = vadd.f32 %v437, %v442
    %444 = vset.pattern.permute.xlu0 3
    %445 = vperm.xlu0 %444, %v425
    %v446 = vpop.permute.xlu0 %445
    %v448 = vadd.f32 %v443, %v446
    %v449 = vmax.f32 %v448, 0.0
    %450 = vset.pattern.permute.xlu0 4
    %451 = vperm.xlu0 %450, %v425
    %v452 = vpop.permute.xlu0 %451
    %v454 = vmul.f32 %v449, %v452
    %v455 = vadd.f32 %v424, %v454
    %v456 = vld [vmem:[%s1 + $0x70] sm:$0xff]
    %458 = vset.pattern.permute.xlu0 0
    %459 = vperm.xlu0 %458, %v456
    %v460 = vpop.permute.xlu0 %459
    %v462 = vmul.f32 %v460, %v17
    %463 = vset.pattern.permute.xlu0 1
    %464 = vperm.xlu0 %463, %v456
    %v465 = vpop.permute.xlu0 %464
    %v467 = vmul.f32 %v465, %v19
    %v468 = vadd.f32 %v462, %v467
    %469 = vset.pattern.permute.xlu0 2
    %470 = vperm.xlu0 %469, %v456
    %v471 = vpop.permute.xlu0 %470
    %v473 = vmul.f32 %v471, %v21
    %v474 = vadd.f32 %v468, %v473
    %475 = vset.pattern.permute.xlu0 3
    %476 = vperm.xlu0 %475, %v456
    %v477 = vpop.permute.xlu0 %476
    %v479 = vadd.f32 %v474, %v477
    %v480 = vmax.f32 %v479, 0.0
    %481 = vset.pattern.permute.xlu0 4
    %482 = vperm.xlu0 %481, %v456
    %v483 = vpop.permute.xlu0 %482
    %v485 = vmul.f32 %v480, %v483
    %v486 = vadd.f32 %v455, %v485
    %v487 = vld [vmem:[%s1 + $0x78] sm:$0xff]
    %489 = vset.pattern.permute.xlu0 0
    %490 = vperm.xlu0 %489, %v487
    %v491 = vpop.permute.xlu0 %490
    %v493 = vmul.f32 %v491, %v17
    %494 = vset.pattern.permute.xlu0 1
    %495 = vperm.xlu0 %494, %v487
    %v496 = vpop.permute.xlu0 %495
    %v498 = vmul.f32 %v496, %v19
    %v499 = vadd.f32 %v493, %v498
    %500 = vset.pattern.permute.xlu0 2
    %501 = vperm.xlu0 %500, %v487
    %v502 = vpop.permute.xlu0 %501
    %v504 = vmul.f32 %v502, %v21
    %v505 = vadd.f32 %v499, %v504
    %506 = vset.pattern.permute.xlu0 3
    %507 = vperm.xlu0 %506, %v487
    %v508 = vpop.permute.xlu0 %507
    %v510 = vadd.f32 %v505, %v508
    %v511 = vmax.f32 %v510, 0.0
    %512 = vset.pattern.permute.xlu0 4
    %513 = vperm.xlu0 %512, %v487
    %v514 = vpop.permute.xlu0 %513
    %v516 = vmul.f32 %v511, %v514
    %v517 = vadd.f32 %v486, %v516
    %v518 = vrot.slane %v517, 4
    %v519 = vadd.f32 %v517, %v518
    %v520 = vrot.slane %v519, 2
    %v521 = vadd.f32 %v519, %v520
    %v522 = vrot.slane %v521, 1
    %v523 = vadd.f32 %v521, %v522
    %s524 = sld [smem:[#allocation2]]
    %v525 = vstv %s524
    %v526 = vadd.f32 %v523, %v525
    %527 = vst [vmem:[#allocation3] sm:$0x1] %v526
    // Predicated region
    $region14: #{tpu_custom_call.1} parent=1 // pred_check
      _
    $region15: #{tpu_custom_call.1} parent=1 // pred_check_branch
      %529 = sbr.rel (0) target = $region17
    $region16: #{tpu_custom_call.1} parent=1 // pred_region
      %531 = vsyncadd [#allocation4], 0
      %s533 = sshll.u32 [#allocation3], 4
      %s534 = int_to_ptr.vmem [resolvable:$true] %s533
      %s535 = sshll.u32 %s3, 4
      %s536 = int_to_ptr.hbm [resolvable:$true] %s535
      %538 = dma.vmem_to_hbm [thread:$0]  %s534, 16, %s536, [#allocation4]
    $region17: #{tpu_custom_call.1} parent=1 // pred_fallthru
      _
    // Predicated region
    $region18: #{tpu_custom_call.1} parent=1 // pred_check
      _
    $region19: #{tpu_custom_call.1} parent=1 // pred_check_branch
      %540 = sbr.rel (0) target = $region21
    $region20: #{tpu_custom_call.1} parent=1 // pred_region
      %542 = dma.done [#allocation4], 16
    $region21: #{tpu_custom_call.1} parent=1 // pred_fallthru
      _
    %543 = vsyncpa [#allocation4], 1

</llo_original>
